<compile_context>
chip_gen: v5e
topology: v5e:2x2
jax: 0.10.0
libtpu: 0.0.40
codegen_flags: <defaults>
</compile_context>

<pallas_src>
import functools

import jax
import jax.numpy as jnp
import numpy as np
from jax.experimental import pallas as pl
from jax.experimental.pallas import tpu as pltpu

_EPS = 1e-08


def _round_up(x, m):
    return (x + m - 1) // m * m


def _vae_kernel(n_enc, n_dec, latent_dim, *refs):
    """Fused VAE forward for one batch tile (eval mode: zpost_samples == z_mean).

    refs = (x,
            [enc_W, enc_b] * n_enc,
            post_W, post_b,               # fused [hidden, 2*latent] = (mean | logstd)
            [dec_W, dec_b] * n_dec,
            out_W, out_b,
            x_gen_out, z_out)             # z_out = [z_mean | z_std], lane-packed
    """
    n_in = 1 + 2 * n_enc + 2 + 2 * n_dec + 2
    in_refs = refs[:n_in]
    x_gen_ref, z_ref = refs[n_in:]

    it = iter(in_refs)
    h = next(it)[...]                       # bf16 [TB, input_dim]

    # ---- encoder: Linear + Tanh per hidden layer (bf16 MXU, f32 accumulate) ----
    for _ in range(n_enc):
        w = next(it)[...]                   # bf16 [in, out]
        b = next(it)[...]                   # f32  [1, out]
        h = jnp.tanh(jnp.dot(h, w, preferred_element_type=jnp.float32) + b)
        h = h.astype(jnp.bfloat16)

    # ---- fused posterior: one matmul for (post_mean | post_logstd) ----
    wp = next(it)[...]                      # bf16 [hidden, 2*latent]
    bp = next(it)[...]                      # f32  [1, 2*latent]
    post = jnp.dot(h, wp, preferred_element_type=jnp.float32) + bp
    z_mean = post[:, :latent_dim]
    z_std = jnp.exp(post[:, latent_dim:]) + _EPS

    # eval mode (self.training == False): zpost_samples = z_mean
    # TODO(synk): training-mode MC sampling (mce_samples randn draws) and the
    # MultivariateNormal distribution object are not materialized in-kernel;
    # the kernel returns (z_mean, z_std), which parameterize that distribution.
    d = z_mean.astype(jnp.bfloat16)

    # ---- decoder: Linear + Tanh per hidden layer (reversed sizes) ----
    for _ in range(n_dec):
        w = next(it)[...]
        b = next(it)[...]
        d = jnp.tanh(jnp.dot(d, w, preferred_element_type=jnp.float32) + b)
        d = d.astype(jnp.bfloat16)

    # ---- output projection back to input_dim (lane-dense: input_dim is x128) ----
    wo = next(it)[...]
    bo = next(it)[...]
    x_gen = jnp.dot(d, wo, preferred_element_type=jnp.float32) + bo

    x_gen_ref[...] = x_gen.astype(x_gen_ref.dtype)
    # Single lane-packed store for the latent outputs (split in the wrapper).
    z_ref[...] = jnp.concatenate([z_mean, z_std], axis=-1).astype(z_ref.dtype)


def init_linear(key, fan_in, fan_out):
    """PyTorch nn.Linear default init (uniform +- 1/sqrt(fan_in)).

    Returns weight already transposed to [in, out] and bias as [1, out]."""
    kw, kb = jax.random.split(key)
    bound = 1.0 / np.sqrt(fan_in)
    w_t = jax.random.uniform(kw, (fan_in, fan_out), jnp.float32, -bound, bound)
    b = jax.random.uniform(kb, (1, fan_out), jnp.float32, -bound, bound)
    return w_t, b


def make_vae_params(key, input_dim, hidden_sizes, latent_dim):
    enc_sizes = [input_dim] + list(hidden_sizes)
    dec_sizes = [latent_dim] + list(hidden_sizes)[::-1]
    params = {"enc": [], "dec": []}
    for i in range(len(enc_sizes) - 1):
        key, k = jax.random.split(key)
        params["enc"].append(init_linear(k, enc_sizes[i], enc_sizes[i + 1]))
    key, k = jax.random.split(key)
    params["post_mean"] = init_linear(k, enc_sizes[-1], latent_dim)
    key, k = jax.random.split(key)
    params["post_logstd"] = init_linear(k, enc_sizes[-1], latent_dim)
    for i in range(len(dec_sizes) - 1):
        key, k = jax.random.split(key)
        params["dec"].append(init_linear(k, dec_sizes[i], dec_sizes[i + 1]))
    key, k = jax.random.split(key)
    params["output"] = init_linear(k, dec_sizes[-1], input_dim)
    return params


def vae_forward(x, params, *, block_b=256):
    """Returns (x_gen, zpost_samples, (z_mean, z_std)) — eval-mode VAE.forward."""
    B, input_dim = x.shape
    latent_dim = params["post_mean"][0].shape[1]
    n_enc = len(params["enc"])
    n_dec = len(params["dec"])

    # ---- host-side packing: bf16 weights, fused posterior projection ----
    def w16(w):
        return w.astype(jnp.bfloat16)

    wm, bm = params["post_mean"]
    wl, bl = params["post_logstd"]
    post_w = jnp.concatenate([wm, wl], axis=1).astype(jnp.bfloat16)
    post_b = jnp.concatenate([bm, bl], axis=1)

    flat_inputs = []
    layer_dims = []
    for w, b in params["enc"]:
        flat_inputs += [w16(w), b]
        layer_dims.append(w.shape)
    flat_inputs += [post_w, post_b]
    layer_dims.append(post_w.shape)
    for w, b in params["dec"]:
        flat_inputs += [w16(w), b]
        layer_dims.append(w.shape)
    wo, bo = params["output"]
    flat_inputs += [w16(wo), bo]
    layer_dims.append(wo.shape)

    # ---- batch tiling (bf16 prefers x16 sublanes; pad batch to a tile multiple) ----
    tb = min(block_b, _round_up(B, 16))
    Bp = _round_up(B, tb)
    xin = x.astype(jnp.bfloat16)
    if Bp != B:
        xin = jnp.pad(xin, ((0, Bp - B), (0, 0)))
    grid = (Bp // tb,)

    x_spec = pl.BlockSpec((tb, input_dim), lambda i: (i, 0))
    # Weights / biases: full-array block with constant index -> DMA'd once,
    # stay VMEM-resident across all grid steps.
    const_specs = [pl.BlockSpec(a.shape, lambda i: (0, 0)) for a in flat_inputs]

    out_shape = (
        jax.ShapeDtypeStruct((Bp, input_dim), jnp.float32),       # x_gen
        jax.ShapeDtypeStruct((Bp, 2 * latent_dim), jnp.float32),  # z_mean | z_std
    )
    out_specs = (
        pl.BlockSpec((tb, input_dim), lambda i: (i, 0)),
        pl.BlockSpec((tb, 2 * latent_dim), lambda i: (i, 0)),
    )

    flops = 2 * Bp * sum(din * dout for din, dout in layer_dims)
    transcendentals = Bp * (
        sum(d[1] for d in layer_dims[:n_enc])                              # enc tanh
        + latent_dim                                                       # exp
        + sum(d[1] for d in layer_dims[n_enc + 1:n_enc + 1 + n_dec])       # dec tanh
    )
    bytes_accessed = (
        xin.nbytes
        + sum(int(a.nbytes) for a in flat_inputs)
        + sum(int(np.prod(s.shape)) * 4 for s in out_shape)
    )

    kernel = functools.partial(_vae_kernel, n_enc, n_dec, latent_dim)
    x_gen, z = pl.pallas_call(
        kernel,
        grid=grid,
        out_shape=out_shape,
        in_specs=[x_spec] + const_specs,
        out_specs=out_specs,
        compiler_params=pltpu.CompilerParams(
            dimension_semantics=("parallel",)),
        cost_estimate=pl.CostEstimate(
            flops=int(flops),
            transcendentals=int(transcendentals),
            bytes_accessed=int(bytes_accessed)),
    )(xin, *flat_inputs)

    x_gen = x_gen[:B]
    z_mean = z[:B, :latent_dim]
    z_std = z[:B, latent_dim:]
    return x_gen, z_mean, (z_mean, z_std)


def vae_forward_ref(x, params):
    """Pure-JAX reference (same bf16-weight / f32-accumulate recipe)."""
    def lin(h, w, b):
        return jnp.dot(h.astype(jnp.bfloat16), w.astype(jnp.bfloat16),
                       preferred_element_type=jnp.float32) + b

    h = x
    for w, b in params["enc"]:
        h = jnp.tanh(lin(h, w, b))
    z_mean = lin(h, *params["post_mean"])
    z_std = jnp.exp(lin(h, *params["post_logstd"])) + _EPS
    d = z_mean
    for w, b in params["dec"]:
        d = jnp.tanh(lin(d, w, b))
    x_gen = lin(d, *params["output"])
    return x_gen, z_mean, (z_mean, z_std)


if __name__ == "__main__":
    # Module hyper-params (consistent with the PyTorch __init__), small shapes:
    num_joints, joint_dims, window_size = 4, 4, 8   # -> input_dim = 128
    hidden_sizes = [64, 32]
    latent_dim = 16
    batch = 64                                      # tiled: grid=(2,), 32-row tiles

    input_dim = num_joints * joint_dims * window_size

    key = jax.random.PRNGKey(0)
    key, kx, kp = jax.random.split(key, 3)
    x = jax.random.normal(kx, (batch, input_dim), jnp.float32)
    params = make_vae_params(kp, input_dim, hidden_sizes, latent_dim)

    x_gen, zpost, (z_mean, z_std) = vae_forward(x, params, block_b=32)
    jax.block_until_ready((x_gen, zpost, z_mean, z_std))

    # Correctness check against the pure-JAX reference (bf16 weights -> ~1e-2 tol).
    rx_gen, rz_mean, (_, rz_std) = vae_forward_ref(x, params)
    np.testing.assert_allclose(np.asarray(x_gen), np.asarray(rx_gen), rtol=2e-2, atol=2e-2)
    np.testing.assert_allclose(np.asarray(zpost), np.asarray(rz_mean), rtol=2e-2, atol=2e-2)
    np.testing.assert_allclose(np.asarray(z_std), np.asarray(rz_std), rtol=2e-2, atol=2e-2)

    print("KERNEL_OK")
</pallas_src>

<mosaic_0001>
module attributes {stable_mosaic.version = 11 : i64} {
  func.func @_vae_kernel(%arg0: i32, %arg1: memref<32x128xbf16, #tpu.memory_space<vmem>>, %arg2: memref<128x64xbf16, #tpu.memory_space<vmem>>, %arg3: memref<1x64xf32, #tpu.memory_space<vmem>>, %arg4: memref<64x32xbf16, #tpu.memory_space<vmem>>, %arg5: memref<1x32xf32, #tpu.memory_space<vmem>>, %arg6: memref<32x32xbf16, #tpu.memory_space<vmem>>, %arg7: memref<1x32xf32, #tpu.memory_space<vmem>>, %arg8: memref<16x32xbf16, #tpu.memory_space<vmem>>, %arg9: memref<1x32xf32, #tpu.memory_space<vmem>>, %arg10: memref<32x64xbf16, #tpu.memory_space<vmem>>, %arg11: memref<1x64xf32, #tpu.memory_space<vmem>>, %arg12: memref<64x128xbf16, #tpu.memory_space<vmem>>, %arg13: memref<1x128xf32, #tpu.memory_space<vmem>>, %arg14: memref<32x128xf32, #tpu.memory_space<vmem>>, %arg15: memref<32x32xf32, #tpu.memory_space<vmem>>) attributes {dimension_semantics = [#tpu.dimension_semantics<parallel>], iteration_bounds = array<i64: 2>, scalar_prefetch = 0 : i64, scratch_operands = 0 : i64, tpu.core_type = #tpu.core_type<tc>, window_params = [{transform_indices = @transform_0, window_bounds = array<i64: 32, 128>}, {pipeline_mode = #tpu.pipeline_mode<synchronous>, transform_indices = @transform_1, window_bounds = array<i64: 128, 64>}, {pipeline_mode = #tpu.pipeline_mode<synchronous>, transform_indices = @transform_2, window_bounds = array<i64: 1, 64>}, {pipeline_mode = #tpu.pipeline_mode<synchronous>, transform_indices = @transform_3, window_bounds = array<i64: 64, 32>}, {pipeline_mode = #tpu.pipeline_mode<synchronous>, transform_indices = @transform_4, window_bounds = array<i64: 1, 32>}, {pipeline_mode = #tpu.pipeline_mode<synchronous>, transform_indices = @transform_5, window_bounds = array<i64: 32, 32>}, {pipeline_mode = #tpu.pipeline_mode<synchronous>, transform_indices = @transform_6, window_bounds = array<i64: 1, 32>}, {pipeline_mode = #tpu.pipeline_mode<synchronous>, transform_indices = @transform_7, window_bounds = array<i64: 16, 32>}, {pipeline_mode = #tpu.pipeline_mode<synchronous>, transform_indices = @transform_8, window_bounds = array<i64: 1, 32>}, {pipeline_mode = #tpu.pipeline_mode<synchronous>, transform_indices = @transform_9, window_bounds = array<i64: 32, 64>}, {pipeline_mode = #tpu.pipeline_mode<synchronous>, transform_indices = @transform_10, window_bounds = array<i64: 1, 64>}, {pipeline_mode = #tpu.pipeline_mode<synchronous>, transform_indices = @transform_11, window_bounds = array<i64: 64, 128>}, {pipeline_mode = #tpu.pipeline_mode<synchronous>, transform_indices = @transform_12, window_bounds = array<i64: 1, 128>}, {transform_indices = @transform_13, window_bounds = array<i64: 32, 128>}, {transform_indices = @transform_14, window_bounds = array<i64: 32, 32>}]} {
    %c0 = arith.constant 0 : index
    %c0_0 = arith.constant 0 : index
    %0 = vector.load %arg1[%c0, %c0_0] : memref<32x128xbf16, #tpu.memory_space<vmem>>, vector<32x128xbf16>
    %c0_1 = arith.constant 0 : index
    %c0_2 = arith.constant 0 : index
    %1 = vector.load %arg2[%c0_1, %c0_2] : memref<128x64xbf16, #tpu.memory_space<vmem>>, vector<128x64xbf16>
    %c0_3 = arith.constant 0 : index
    %c0_4 = arith.constant 0 : index
    %2 = vector.load %arg3[%c0_3, %c0_4] : memref<1x64xf32, #tpu.memory_space<vmem>>, vector<1x64xf32>
    %cst = arith.constant dense<0.000000e+00> : vector<32x64xf32>
    %3 = tpu.matmul %0, %1, %cst {dimension_numbers = #tpu.dot_dimension_numbers<[1], [0], [0], [1], [0, 0, 1, 1], [], []>} : vector<32x128xbf16>, vector<128x64xbf16>, vector<32x64xf32> -> vector<32x64xf32>
    %4 = vector.broadcast %2 : vector<1x64xf32> to vector<32x64xf32>
    %5 = arith.addf %3, %4 : vector<32x64xf32>
    %6 = math.tanh %5 : vector<32x64xf32>
    %7 = arith.truncf %6 : vector<32x64xf32> to vector<32x64xbf16>
    %c0_5 = arith.constant 0 : index
    %c0_6 = arith.constant 0 : index
    %8 = vector.load %arg4[%c0_5, %c0_6] : memref<64x32xbf16, #tpu.memory_space<vmem>>, vector<64x32xbf16>
    %c0_7 = arith.constant 0 : index
    %c0_8 = arith.constant 0 : index
    %9 = vector.load %arg5[%c0_7, %c0_8] : memref<1x32xf32, #tpu.memory_space<vmem>>, vector<1x32xf32>
    %cst_9 = arith.constant dense<0.000000e+00> : vector<32x32xf32>
    %10 = tpu.matmul %7, %8, %cst_9 {dimension_numbers = #tpu.dot_dimension_numbers<[1], [0], [0], [1], [0, 0, 1, 1], [], []>} : vector<32x64xbf16>, vector<64x32xbf16>, vector<32x32xf32> -> vector<32x32xf32>
    %11 = vector.broadcast %9 : vector<1x32xf32> to vector<32x32xf32>
    %12 = arith.addf %10, %11 : vector<32x32xf32>
    %13 = math.tanh %12 : vector<32x32xf32>
    %14 = arith.truncf %13 : vector<32x32xf32> to vector<32x32xbf16>
    %c0_10 = arith.constant 0 : index
    %c0_11 = arith.constant 0 : index
    %15 = vector.load %arg6[%c0_10, %c0_11] : memref<32x32xbf16, #tpu.memory_space<vmem>>, vector<32x32xbf16>
    %c0_12 = arith.constant 0 : index
    %c0_13 = arith.constant 0 : index
    %16 = vector.load %arg7[%c0_12, %c0_13] : memref<1x32xf32, #tpu.memory_space<vmem>>, vector<1x32xf32>
    %cst_14 = arith.constant dense<0.000000e+00> : vector<32x32xf32>
    %17 = tpu.matmul %14, %15, %cst_14 {dimension_numbers = #tpu.dot_dimension_numbers<[1], [0], [0], [1], [0, 0, 1, 1], [], []>} : vector<32x32xbf16>, vector<32x32xbf16>, vector<32x32xf32> -> vector<32x32xf32>
    %18 = vector.broadcast %16 : vector<1x32xf32> to vector<32x32xf32>
    %19 = arith.addf %17, %18 : vector<32x32xf32>
    %20 = vector.extract_strided_slice %19 {offsets = [0, 0], sizes = [32, 16], strides = [1, 1]} : vector<32x32xf32> to vector<32x16xf32>
    %21 = vector.extract_strided_slice %19 {offsets = [0, 16], sizes = [32, 16], strides = [1, 1]} : vector<32x32xf32> to vector<32x16xf32>
    %22 = math.exp %21 : vector<32x16xf32>
    %cst_15 = arith.constant 9.99999993E-9 : f32
    %23 = vector.broadcast %cst_15 : f32 to vector<32x16xf32>
    %24 = arith.addf %22, %23 : vector<32x16xf32>
    %25 = arith.truncf %20 : vector<32x16xf32> to vector<32x16xbf16>
    %c0_16 = arith.constant 0 : index
    %c0_17 = arith.constant 0 : index
    %26 = vector.load %arg8[%c0_16, %c0_17] : memref<16x32xbf16, #tpu.memory_space<vmem>>, vector<16x32xbf16>
    %c0_18 = arith.constant 0 : index
    %c0_19 = arith.constant 0 : index
    %27 = vector.load %arg9[%c0_18, %c0_19] : memref<1x32xf32, #tpu.memory_space<vmem>>, vector<1x32xf32>
    %cst_20 = arith.constant dense<0.000000e+00> : vector<32x32xf32>
    %28 = tpu.matmul %25, %26, %cst_20 {dimension_numbers = #tpu.dot_dimension_numbers<[1], [0], [0], [1], [0, 0, 1, 1], [], []>} : vector<32x16xbf16>, vector<16x32xbf16>, vector<32x32xf32> -> vector<32x32xf32>
    %29 = vector.broadcast %27 : vector<1x32xf32> to vector<32x32xf32>
    %30 = arith.addf %28, %29 : vector<32x32xf32>
    %31 = math.tanh %30 : vector<32x32xf32>
    %32 = arith.truncf %31 : vector<32x32xf32> to vector<32x32xbf16>
    %c0_21 = arith.constant 0 : index
    %c0_22 = arith.constant 0 : index
    %33 = vector.load %arg10[%c0_21, %c0_22] : memref<32x64xbf16, #tpu.memory_space<vmem>>, vector<32x64xbf16>
    %c0_23 = arith.constant 0 : index
    %c0_24 = arith.constant 0 : index
    %34 = vector.load %arg11[%c0_23, %c0_24] : memref<1x64xf32, #tpu.memory_space<vmem>>, vector<1x64xf32>
    %cst_25 = arith.constant dense<0.000000e+00> : vector<32x64xf32>
    %35 = tpu.matmul %32, %33, %cst_25 {dimension_numbers = #tpu.dot_dimension_numbers<[1], [0], [0], [1], [0, 0, 1, 1], [], []>} : vector<32x32xbf16>, vector<32x64xbf16>, vector<32x64xf32> -> vector<32x64xf32>
    %36 = vector.broadcast %34 : vector<1x64xf32> to vector<32x64xf32>
    %37 = arith.addf %35, %36 : vector<32x64xf32>
    %38 = math.tanh %37 : vector<32x64xf32>
    %39 = arith.truncf %38 : vector<32x64xf32> to vector<32x64xbf16>
    %c0_26 = arith.constant 0 : index
    %c0_27 = arith.constant 0 : index
    %40 = vector.load %arg12[%c0_26, %c0_27] : memref<64x128xbf16, #tpu.memory_space<vmem>>, vector<64x128xbf16>
    %c0_28 = arith.constant 0 : index
    %c0_29 = arith.constant 0 : index
    %41 = vector.load %arg13[%c0_28, %c0_29] : memref<1x128xf32, #tpu.memory_space<vmem>>, vector<1x128xf32>
    %cst_30 = arith.constant dense<0.000000e+00> : vector<32x128xf32>
    %42 = tpu.matmul %39, %40, %cst_30 {dimension_numbers = #tpu.dot_dimension_numbers<[1], [0], [0], [1], [0, 0, 1, 1], [], []>} : vector<32x64xbf16>, vector<64x128xbf16>, vector<32x128xf32> -> vector<32x128xf32>
    %43 = vector.broadcast %41 : vector<1x128xf32> to vector<32x128xf32>
    %44 = arith.addf %42, %43 : vector<32x128xf32>
    %c0_31 = arith.constant 0 : index
    %c0_32 = arith.constant 0 : index
    %45 = vector.load %arg14[%c0_31, %c0_32] : memref<32x128xf32, #tpu.memory_space<vmem>>, vector<32x128xf32>
    tpu.vector_store %arg14[%c0_31, %c0_32], %44 {strides = array<i32>} : memref<32x128xf32, #tpu.memory_space<vmem>>, vector<32x128xf32>,
    %46 = tpu.concatenate %20, %24 in 1 : vector<32x16xf32>, vector<32x16xf32> -> vector<32x32xf32>
    %c0_33 = arith.constant 0 : index
    %c0_34 = arith.constant 0 : index
    %47 = vector.load %arg15[%c0_33, %c0_34] : memref<32x32xf32, #tpu.memory_space<vmem>>, vector<32x32xf32>
    tpu.vector_store %arg15[%c0_33, %c0_34], %46 {strides = array<i32>} : memref<32x32xf32, #tpu.memory_space<vmem>>, vector<32x32xf32>,
    return
  }
  func.func @transform_0(%arg0: i32) -> (i32, i32) {
    %c0_i32 = arith.constant 0 : i32
    %c0_i32_0 = arith.constant 0 : i32
    return %arg0, %c0_i32 : i32, i32
  }
  func.func @transform_1(%arg0: i32) -> (i32, i32) {
    %c0_i32 = arith.constant 0 : i32
    %c0_i32_0 = arith.constant 0 : i32
    %c0_i32_1 = arith.constant 0 : i32
    return %c0_i32, %c0_i32_0 : i32, i32
  }
  func.func @transform_2(%arg0: i32) -> (i32, i32) {
    %c0_i32 = arith.constant 0 : i32
    %c0_i32_0 = arith.constant 0 : i32
    %c0_i32_1 = arith.constant 0 : i32
    return %c0_i32, %c0_i32_0 : i32, i32
  }
  func.func @transform_3(%arg0: i32) -> (i32, i32) {
    %c0_i32 = arith.constant 0 : i32
    %c0_i32_0 = arith.constant 0 : i32
    %c0_i32_1 = arith.constant 0 : i32
    return %c0_i32, %c0_i32_0 : i32, i32
  }
  func.func @transform_4(%arg0: i32) -> (i32, i32) {
    %c0_i32 = arith.constant 0 : i32
    %c0_i32_0 = arith.constant 0 : i32
    %c0_i32_1 = arith.constant 0 : i32
    return %c0_i32, %c0_i32_0 : i32, i32
  }
  func.func @transform_5(%arg0: i32) -> (i32, i32) {
    %c0_i32 = arith.constant 0 : i32
    %c0_i32_0 = arith.constant 0 : i32
    %c0_i32_1 = arith.constant 0 : i32
    return %c0_i32, %c0_i32_0 : i32, i32
  }
  func.func @transform_6(%arg0: i32) -> (i32, i32) {
    %c0_i32 = arith.constant 0 : i32
    %c0_i32_0 = arith.constant 0 : i32
    %c0_i32_1 = arith.constant 0 : i32
    return %c0_i32, %c0_i32_0 : i32, i32
  }
  func.func @transform_7(%arg0: i32) -> (i32, i32) {
    %c0_i32 = arith.constant 0 : i32
    %c0_i32_0 = arith.constant 0 : i32
    %c0_i32_1 = arith.constant 0 : i32
    return %c0_i32, %c0_i32_0 : i32, i32
  }
  func.func @transform_8(%arg0: i32) -> (i32, i32) {
    %c0_i32 = arith.constant 0 : i32
    %c0_i32_0 = arith.constant 0 : i32
    %c0_i32_1 = arith.constant 0 : i32
    return %c0_i32, %c0_i32_0 : i32, i32
  }
  func.func @transform_9(%arg0: i32) -> (i32, i32) {
    %c0_i32 = arith.constant 0 : i32
    %c0_i32_0 = arith.constant 0 : i32
    %c0_i32_1 = arith.constant 0 : i32
    return %c0_i32, %c0_i32_0 : i32, i32
  }
  func.func @transform_10(%arg0: i32) -> (i32, i32) {
    %c0_i32 = arith.constant 0 : i32
    %c0_i32_0 = arith.constant 0 : i32
    %c0_i32_1 = arith.constant 0 : i32
    return %c0_i32, %c0_i32_0 : i32, i32
  }
  func.func @transform_11(%arg0: i32) -> (i32, i32) {
    %c0_i32 = arith.constant 0 : i32
    %c0_i32_0 = arith.constant 0 : i32
    %c0_i32_1 = arith.constant 0 : i32
    return %c0_i32, %c0_i32_0 : i32, i32
  }
  func.func @transform_12(%arg0: i32) -> (i32, i32) {
    %c0_i32 = arith.constant 0 : i32
    %c0_i32_0 = arith.constant 0 : i32
    %c0_i32_1 = arith.constant 0 : i32
    return %c0_i32, %c0_i32_0 : i32, i32
  }
  func.func @transform_13(%arg0: i32) -> (i32, i32) {
    %c0_i32 = arith.constant 0 : i32
    %c0_i32_0 = arith.constant 0 : i32
    return %arg0, %c0_i32 : i32, i32
  }
  func.func @transform_14(%arg0: i32) -> (i32, i32) {
    %c0_i32 = arith.constant 0 : i32
    %c0_i32_0 = arith.constant 0 : i32
    return %arg0, %c0_i32 : i32, i32
  }
}

</mosaic_0001>

<llo_original>
// kernel: tpu_custom_call.1
$region0: #{tpu_custom_call.1}
  #allocation0 [shape = 'u32[]', space=smem, size = 0x4, offset = 0x4, fixed_abs, tag = 'smem constant byte address 0x4 - core index']
  #allocation1 [shape = 'u32[72,128]{1,0:T(1,128)}', space=vmem, size = 0x9000, scoped, tag = 'internal scratch']
  %s0 = inlined_call_operand.vmem [shape: bf16[64,128], index: 0, kind: input, shape index: {}]
  %s1 = inlined_call_operand.vmem [shape: bf16[128,64], index: 1, kind: input, shape index: {}]
  %s2 = inlined_call_operand.vmem [shape: f32[1,64], index: 2, kind: input, shape index: {}]
  %s3 = inlined_call_operand.vmem [shape: bf16[64,32], index: 3, kind: input, shape index: {}]
  %s4 = inlined_call_operand.vmem [shape: f32[1,32], index: 4, kind: input, shape index: {}]
  %s5 = inlined_call_operand.vmem [shape: bf16[32,32], index: 5, kind: input, shape index: {}]
  %s6 = inlined_call_operand.vmem [shape: f32[1,32], index: 6, kind: input, shape index: {}]
  %s7 = inlined_call_operand.vmem [shape: bf16[16,32], index: 7, kind: input, shape index: {}]
  %s8 = inlined_call_operand.vmem [shape: f32[1,32], index: 8, kind: input, shape index: {}]
  %s9 = inlined_call_operand.vmem [shape: bf16[32,64], index: 9, kind: input, shape index: {}]
  %s10 = inlined_call_operand.vmem [shape: f32[1,64], index: 10, kind: input, shape index: {}]
  %s11 = inlined_call_operand.vmem [shape: bf16[64,128], index: 11, kind: input, shape index: {}]
  %s12 = inlined_call_operand.vmem [shape: f32[1,128], index: 12, kind: input, shape index: {}]
  %s13 = inlined_call_operand.hbm [shape: f32[64,128], index: 13, kind: output, shape index: {0}]
  %s14 = inlined_call_operand.vmem [shape: f32[64,32], index: 14, kind: output, shape index: {1}]
  %15 = xla_tuple %s13, %s14
  %s16 = sld [smem:[#allocation0]]
  $region93: #{tpu_custom_call.1} parent=0
    _
  %s18 = ssub.s32 1, %s16
  %s19 = scalar_select 0, %s18, %s16
  $region1: #{tpu_custom_call.1} parent=0
    #allocation2 [shape = 'u8[32768]{0}', space=vmem, size = 0x8000, scoped, tag = 'output window, operand 0']
    #allocation3 [shape = 's32[2]{0}', space=sflag, size = 0x8, scoped, tag = 'scoped memory for tpu_custom_call.1']
    %20 = vsyncpa [#allocation3], 0
    %s21 = scalar_lea.sflag [#allocation3], 1
    %22 = vsyncpa %s21, 0
    loop: start=0, step=1, limit=4
    $region2: #{tpu_custom_call.1} parent=1 // loop_pre_header
      _
    $region3: #{tpu_custom_call.1} parent=1 // loop_header
      %s24 = sphi 0, %s28
      %p25 = scmp.ge.s32.totalorder %s24, 4
      %s34 = sphi 0, %s36
      %s37 = sphi 0, %s34
      %s38 = sphi 0, %s37
      %s54 = sphi 0, %s38
      %s58 = sphi 0, %s58
      %s60 = sphi 0, %s58
      %s61 = sphi 0, %s60
      %s75 = sphi 0, %s61
      %s79 = sphi 0, %s79
      %s81 = sphi 0, %s79
      %s82 = sphi 0, %s81
      %s96 = sphi 0, %s82
      %s100 = sphi 0, %s100
      %s102 = sphi 0, %s100
      %s103 = sphi 0, %s102
      %s117 = sphi 0, %s103
      %s121 = sphi 0, %s121
      %s123 = sphi 0, %s121
      %s124 = sphi 0, %s123
      %s138 = sphi 0, %s124
      %s142 = sphi 0, %s142
      %s144 = sphi 0, %s142
      %s145 = sphi 0, %s144
      %s159 = sphi 0, %s145
      %s163 = sphi 0, %s163
      %s165 = sphi 0, %s163
      %s166 = sphi 0, %s165
      %s180 = sphi 0, %s166
      %s184 = sphi 0, %s184
      %s186 = sphi 0, %s184
      %s187 = sphi 0, %s186
      %s201 = sphi 0, %s187
      %s205 = sphi 0, %s205
      %s207 = sphi 0, %s205
      %s208 = sphi 0, %s207
      %s222 = sphi 0, %s208
      %s226 = sphi 0, %s226
      %s228 = sphi 0, %s226
      %s229 = sphi 0, %s228
      %s243 = sphi 0, %s229
      %s247 = sphi 0, %s247
      %s249 = sphi 0, %s247
      %s250 = sphi 0, %s249
      %s264 = sphi 0, %s250
      %s268 = sphi 0, %s268
      %s270 = sphi 0, %s268
      %s271 = sphi 0, %s270
      %s285 = sphi 0, %s271
      %s289 = sphi 0, %s289
      %s291 = sphi 0, %s289
      %s292 = sphi 0, %s291
      %s306 = sphi 0, %s292
      %s312 = sphi 0, %s314
      %s315 = sphi 0, %s312
      %s316 = sphi 0, %s315
      %s332 = sphi 0, %s316
      %s338 = sphi 0, %s340
      %s341 = sphi 0, %s338
      %s342 = sphi 0, %s341
      %s358 = sphi 0, %s342
    $region4: #{tpu_custom_call.1} parent=1 // loop_header_branch
      %27 = sbr.rel (%p25) target = $region8
    $region5: #{tpu_custom_call.1} parent=1 // loop_body
      %s29 = ssub.s32 %s24, 1
      %s30 = ssub.s32 %s24, 2
      %s31 = sadd.s32 %s24, 1
      %s32 = ssub.s32 %s24, %s31
      %p33 = scmp.eq.s32.totalorder %s32, 0
      %s35 = sadd.s32 %s34, 1
      %s36 = scalar_select %p33, %s34, %s35
      %p39 = pneg %p33
      %p40 = scmp.eq.s32.totalorder %s24, 1
      %p41 = por %p39, %p40
      %p42 = scmp.ne.s32.totalorder %s34, %s37
      %p43 = scmp.eq.s32.totalorder %s24, 0
      %p44 = por %p42, %p43
      %p45 = scmp.ne.s32.totalorder %s34, %s37
      %p46 = scmp.eq.s32.totalorder %s29, 1
      %p47 = por %p45, %p46
      %p48 = scmp.ne.s32.totalorder %s37, %s38
      %p49 = scmp.eq.s32.totalorder %s29, 0
      %p50 = por %p48, %p49
      %p51 = scmp.ne.s32.totalorder %s37, %s38
      %p52 = scmp.eq.s32.totalorder %s30, 1
      %p53 = por %p51, %p52
      %p55 = scmp.ne.s32.totalorder %s38, %s54
      %p56 = scmp.eq.s32.totalorder %s30, 0
      %p57 = por %p55, %p56
      %s59 = sadd.s32 %s58, 1
      %p62 = scmp.eq.s32.totalorder %s24, 1
      %p63 = scmp.ne.s32.totalorder %s58, %s60
      %p64 = scmp.eq.s32.totalorder %s24, 0
      %p65 = por %p63, %p64
      %p66 = scmp.ne.s32.totalorder %s58, %s60
      %p67 = scmp.eq.s32.totalorder %s29, 1
      %p68 = por %p66, %p67
      %p69 = scmp.ne.s32.totalorder %s60, %s61
      %p70 = scmp.eq.s32.totalorder %s29, 0
      %p71 = por %p69, %p70
      %p72 = scmp.ne.s32.totalorder %s60, %s61
      %p73 = scmp.eq.s32.totalorder %s30, 1
      %p74 = por %p72, %p73
      %p76 = scmp.ne.s32.totalorder %s61, %s75
      %p77 = scmp.eq.s32.totalorder %s30, 0
      %p78 = por %p76, %p77
      %s80 = sadd.s32 %s79, 1
      %p83 = scmp.eq.s32.totalorder %s24, 1
      %p84 = scmp.ne.s32.totalorder %s79, %s81
      %p85 = scmp.eq.s32.totalorder %s24, 0
      %p86 = por %p84, %p85
      %p87 = scmp.ne.s32.totalorder %s79, %s81
      %p88 = scmp.eq.s32.totalorder %s29, 1
      %p89 = por %p87, %p88
      %p90 = scmp.ne.s32.totalorder %s81, %s82
      %p91 = scmp.eq.s32.totalorder %s29, 0
      %p92 = por %p90, %p91
      %p93 = scmp.ne.s32.totalorder %s81, %s82
      %p94 = scmp.eq.s32.totalorder %s30, 1
      %p95 = por %p93, %p94
      %p97 = scmp.ne.s32.totalorder %s82, %s96
      %p98 = scmp.eq.s32.totalorder %s30, 0
      %p99 = por %p97, %p98
      %s101 = sadd.s32 %s100, 1
      %p104 = scmp.eq.s32.totalorder %s24, 1
      %p105 = scmp.ne.s32.totalorder %s100, %s102
      %p106 = scmp.eq.s32.totalorder %s24, 0
      %p107 = por %p105, %p106
      %p108 = scmp.ne.s32.totalorder %s100, %s102
      %p109 = scmp.eq.s32.totalorder %s29, 1
      %p110 = por %p108, %p109
      %p111 = scmp.ne.s32.totalorder %s102, %s103
      %p112 = scmp.eq.s32.totalorder %s29, 0
      %p113 = por %p111, %p112
      %p114 = scmp.ne.s32.totalorder %s102, %s103
      %p115 = scmp.eq.s32.totalorder %s30, 1
      %p116 = por %p114, %p115
      %p118 = scmp.ne.s32.totalorder %s103, %s117
      %p119 = scmp.eq.s32.totalorder %s30, 0
      %p120 = por %p118, %p119
      %s122 = sadd.s32 %s121, 1
      %p125 = scmp.eq.s32.totalorder %s24, 1
      %p126 = scmp.ne.s32.totalorder %s121, %s123
      %p127 = scmp.eq.s32.totalorder %s24, 0
      %p128 = por %p126, %p127
      %p129 = scmp.ne.s32.totalorder %s121, %s123
      %p130 = scmp.eq.s32.totalorder %s29, 1
      %p131 = por %p129, %p130
      %p132 = scmp.ne.s32.totalorder %s123, %s124
      %p133 = scmp.eq.s32.totalorder %s29, 0
      %p134 = por %p132, %p133
      %p135 = scmp.ne.s32.totalorder %s123, %s124
      %p136 = scmp.eq.s32.totalorder %s30, 1
      %p137 = por %p135, %p136
      %p139 = scmp.ne.s32.totalorder %s124, %s138
      %p140 = scmp.eq.s32.totalorder %s30, 0
      %p141 = por %p139, %p140
      %s143 = sadd.s32 %s142, 1
      %p146 = scmp.eq.s32.totalorder %s24, 1
      %p147 = scmp.ne.s32.totalorder %s142, %s144
      %p148 = scmp.eq.s32.totalorder %s24, 0
      %p149 = por %p147, %p148
      %p150 = scmp.ne.s32.totalorder %s142, %s144
      %p151 = scmp.eq.s32.totalorder %s29, 1
      %p152 = por %p150, %p151
      %p153 = scmp.ne.s32.totalorder %s144, %s145
      %p154 = scmp.eq.s32.totalorder %s29, 0
      %p155 = por %p153, %p154
      %p156 = scmp.ne.s32.totalorder %s144, %s145
      %p157 = scmp.eq.s32.totalorder %s30, 1
      %p158 = por %p156, %p157
      %p160 = scmp.ne.s32.totalorder %s145, %s159
      %p161 = scmp.eq.s32.totalorder %s30, 0
      %p162 = por %p160, %p161
      %s164 = sadd.s32 %s163, 1
      %p167 = scmp.eq.s32.totalorder %s24, 1
      %p168 = scmp.ne.s32.totalorder %s163, %s165
      %p169 = scmp.eq.s32.totalorder %s24, 0
      %p170 = por %p168, %p169
      %p171 = scmp.ne.s32.totalorder %s163, %s165
      %p172 = scmp.eq.s32.totalorder %s29, 1
      %p173 = por %p171, %p172
      %p174 = scmp.ne.s32.totalorder %s165, %s166
      %p175 = scmp.eq.s32.totalorder %s29, 0
      %p176 = por %p174, %p175
      %p177 = scmp.ne.s32.totalorder %s165, %s166
      %p178 = scmp.eq.s32.totalorder %s30, 1
      %p179 = por %p177, %p178
      %p181 = scmp.ne.s32.totalorder %s166, %s180
      %p182 = scmp.eq.s32.totalorder %s30, 0
      %p183 = por %p181, %p182
      %s185 = sadd.s32 %s184, 1
      %p188 = scmp.eq.s32.totalorder %s24, 1
      %p189 = scmp.ne.s32.totalorder %s184, %s186
      %p190 = scmp.eq.s32.totalorder %s24, 0
      %p191 = por %p189, %p190
      %p192 = scmp.ne.s32.totalorder %s184, %s186
      %p193 = scmp.eq.s32.totalorder %s29, 1
      %p194 = por %p192, %p193
      %p195 = scmp.ne.s32.totalorder %s186, %s187
      %p196 = scmp.eq.s32.totalorder %s29, 0
      %p197 = por %p195, %p196
      %p198 = scmp.ne.s32.totalorder %s186, %s187
      %p199 = scmp.eq.s32.totalorder %s30, 1
      %p200 = por %p198, %p199
      %p202 = scmp.ne.s32.totalorder %s187, %s201
      %p203 = scmp.eq.s32.totalorder %s30, 0
      %p204 = por %p202, %p203
      %s206 = sadd.s32 %s205, 1
      %p209 = scmp.eq.s32.totalorder %s24, 1
      %p210 = scmp.ne.s32.totalorder %s205, %s207
      %p211 = scmp.eq.s32.totalorder %s24, 0
      %p212 = por %p210, %p211
      %p213 = scmp.ne.s32.totalorder %s205, %s207
      %p214 = scmp.eq.s32.totalorder %s29, 1
      %p215 = por %p213, %p214
      %p216 = scmp.ne.s32.totalorder %s207, %s208
      %p217 = scmp.eq.s32.totalorder %s29, 0
      %p218 = por %p216, %p217
      %p219 = scmp.ne.s32.totalorder %s207, %s208
      %p220 = scmp.eq.s32.totalorder %s30, 1
      %p221 = por %p219, %p220
      %p223 = scmp.ne.s32.totalorder %s208, %s222
      %p224 = scmp.eq.s32.totalorder %s30, 0
      %p225 = por %p223, %p224
      %s227 = sadd.s32 %s226, 1
      %p230 = scmp.eq.s32.totalorder %s24, 1
      %p231 = scmp.ne.s32.totalorder %s226, %s228
      %p232 = scmp.eq.s32.totalorder %s24, 0
      %p233 = por %p231, %p232
      %p234 = scmp.ne.s32.totalorder %s226, %s228
      %p235 = scmp.eq.s32.totalorder %s29, 1
      %p236 = por %p234, %p235
      %p237 = scmp.ne.s32.totalorder %s228, %s229
      %p238 = scmp.eq.s32.totalorder %s29, 0
      %p239 = por %p237, %p238
      %p240 = scmp.ne.s32.totalorder %s228, %s229
      %p241 = scmp.eq.s32.totalorder %s30, 1
      %p242 = por %p240, %p241
      %p244 = scmp.ne.s32.totalorder %s229, %s243
      %p245 = scmp.eq.s32.totalorder %s30, 0
      %p246 = por %p244, %p245
      %s248 = sadd.s32 %s247, 1
      %p251 = scmp.eq.s32.totalorder %s24, 1
      %p252 = scmp.ne.s32.totalorder %s247, %s249
      %p253 = scmp.eq.s32.totalorder %s24, 0
      %p254 = por %p252, %p253
      %p255 = scmp.ne.s32.totalorder %s247, %s249
      %p256 = scmp.eq.s32.totalorder %s29, 1
      %p257 = por %p255, %p256
      %p258 = scmp.ne.s32.totalorder %s249, %s250
      %p259 = scmp.eq.s32.totalorder %s29, 0
      %p260 = por %p258, %p259
      %p261 = scmp.ne.s32.totalorder %s249, %s250
      %p262 = scmp.eq.s32.totalorder %s30, 1
      %p263 = por %p261, %p262
      %p265 = scmp.ne.s32.totalorder %s250, %s264
      %p266 = scmp.eq.s32.totalorder %s30, 0
      %p267 = por %p265, %p266
      %s269 = sadd.s32 %s268, 1
      %p272 = scmp.eq.s32.totalorder %s24, 1
      %p273 = scmp.ne.s32.totalorder %s268, %s270
      %p274 = scmp.eq.s32.totalorder %s24, 0
      %p275 = por %p273, %p274
      %p276 = scmp.ne.s32.totalorder %s268, %s270
      %p277 = scmp.eq.s32.totalorder %s29, 1
      %p278 = por %p276, %p277
      %p279 = scmp.ne.s32.totalorder %s270, %s271
      %p280 = scmp.eq.s32.totalorder %s29, 0
      %p281 = por %p279, %p280
      %p282 = scmp.ne.s32.totalorder %s270, %s271
      %p283 = scmp.eq.s32.totalorder %s30, 1
      %p284 = por %p282, %p283
      %p286 = scmp.ne.s32.totalorder %s271, %s285
      %p287 = scmp.eq.s32.totalorder %s30, 0
      %p288 = por %p286, %p287
      %s290 = sadd.s32 %s289, 1
      %p293 = scmp.eq.s32.totalorder %s24, 1
      %p294 = scmp.ne.s32.totalorder %s289, %s291
      %p295 = scmp.eq.s32.totalorder %s24, 0
      %p296 = por %p294, %p295
      %p297 = scmp.ne.s32.totalorder %s289, %s291
      %p298 = scmp.eq.s32.totalorder %s29, 1
      %p299 = por %p297, %p298
      %p300 = scmp.ne.s32.totalorder %s291, %s292
      %p301 = scmp.eq.s32.totalorder %s29, 0
      %p302 = por %p300, %p301
      %p303 = scmp.ne.s32.totalorder %s291, %s292
      %p304 = scmp.eq.s32.totalorder %s30, 1
      %p305 = por %p303, %p304
      %p307 = scmp.ne.s32.totalorder %s292, %s306
      %p308 = scmp.eq.s32.totalorder %s30, 0
      %p309 = por %p307, %p308
      %s310 = ssub.s32 %s24, %s31
      %p311 = scmp.eq.s32.totalorder %s310, 0
      %s313 = sadd.s32 %s312, 1
      %s314 = scalar_select %p311, %s312, %s313
      %p317 = pneg %p311
      %p318 = scmp.eq.s32.totalorder %s24, 1
      %p319 = por %p317, %p318
      %p320 = scmp.ne.s32.totalorder %s312, %s315
      %p321 = scmp.eq.s32.totalorder %s24, 0
      %p322 = por %p320, %p321
      %p323 = scmp.ne.s32.totalorder %s312, %s315
      %p324 = scmp.eq.s32.totalorder %s29, 1
      %p325 = por %p323, %p324
      %p326 = scmp.ne.s32.totalorder %s315, %s316
      %p327 = scmp.eq.s32.totalorder %s29, 0
      %p328 = por %p326, %p327
      %p329 = scmp.ne.s32.totalorder %s315, %s316
      %p330 = scmp.eq.s32.totalorder %s30, 1
      %p331 = por %p329, %p330
      %p333 = scmp.ne.s32.totalorder %s316, %s332
      %p334 = scmp.eq.s32.totalorder %s30, 0
      %p335 = por %p333, %p334
      %s336 = ssub.s32 %s24, %s31
      %p337 = scmp.eq.s32.totalorder %s336, 0
      %s339 = sadd.s32 %s338, 1
      %s340 = scalar_select %p337, %s338, %s339
      %p343 = pneg %p337
      %p344 = scmp.eq.s32.totalorder %s24, 1
      %p345 = por %p343, %p344
      %p346 = scmp.ne.s32.totalorder %s338, %s341
      %p347 = scmp.eq.s32.totalorder %s24, 0
      %p348 = por %p346, %p347
      %p349 = scmp.ne.s32.totalorder %s338, %s341
      %p350 = scmp.eq.s32.totalorder %s29, 1
      %p351 = por %p349, %p350
      %p352 = scmp.ne.s32.totalorder %s341, %s342
      %p353 = scmp.eq.s32.totalorder %s29, 0
      %p354 = por %p352, %p353
      %p355 = scmp.ne.s32.totalorder %s341, %s342
      %p356 = scmp.eq.s32.totalorder %s30, 1
      %p357 = por %p355, %p356
      %p359 = scmp.ne.s32.totalorder %s342, %s358
      %p360 = scmp.eq.s32.totalorder %s30, 0
      %p361 = por %p359, %p360
      %p362 = scmp.le.s32.totalorder 1, %s24
      %p363 = scmp.lt.s32.totalorder %s24, 3
      %p364 = pnand %p362, %p363
      %p365 = pneg %p364
      // Predicated region
      $region9: #{tpu_custom_call.1} parent=5 // pred_check
        _
      $region10: #{tpu_custom_call.1} parent=5 // pred_check_branch
        %367 = sbr.rel (%p364) target = $region12
      $region11: #{tpu_custom_call.1} parent=5 // pred_region
        %s368 = ssub.s32 %s24, 1
        // Predicated region
        $region13: #{tpu_custom_call.1} parent=11 // pred_check
          %p369 = pneg %p71
        $region14: #{tpu_custom_call.1} parent=11 // pred_check_branch
          %371 = sbr.rel (%p369) target = $region16
        $region15: #{tpu_custom_call.1} parent=11 // pred_region
          _
        $region16: #{tpu_custom_call.1} parent=11 // pred_fallthru
          _
        // Predicated region
        $region17: #{tpu_custom_call.1} parent=11 // pred_check
          %p372 = pneg %p92
        $region18: #{tpu_custom_call.1} parent=11 // pred_check_branch
          %374 = sbr.rel (%p372) target = $region20
        $region19: #{tpu_custom_call.1} parent=11 // pred_region
          _
        $region20: #{tpu_custom_call.1} parent=11 // pred_fallthru
          _
        // Predicated region
        $region21: #{tpu_custom_call.1} parent=11 // pred_check
          %p375 = pneg %p113
        $region22: #{tpu_custom_call.1} parent=11 // pred_check_branch
          %377 = sbr.rel (%p375) target = $region24
        $region23: #{tpu_custom_call.1} parent=11 // pred_region
          _
        $region24: #{tpu_custom_call.1} parent=11 // pred_fallthru
          _
        // Predicated region
        $region25: #{tpu_custom_call.1} parent=11 // pred_check
          %p378 = pneg %p134
        $region26: #{tpu_custom_call.1} parent=11 // pred_check_branch
          %380 = sbr.rel (%p378) target = $region28
        $region27: #{tpu_custom_call.1} parent=11 // pred_region
          _
        $region28: #{tpu_custom_call.1} parent=11 // pred_fallthru
          _
        // Predicated region
        $region29: #{tpu_custom_call.1} parent=11 // pred_check
          %p381 = pneg %p155
        $region30: #{tpu_custom_call.1} parent=11 // pred_check_branch
          %383 = sbr.rel (%p381) target = $region32
        $region31: #{tpu_custom_call.1} parent=11 // pred_region
          _
        $region32: #{tpu_custom_call.1} parent=11 // pred_fallthru
          _
        // Predicated region
        $region33: #{tpu_custom_call.1} parent=11 // pred_check
          %p384 = pneg %p176
        $region34: #{tpu_custom_call.1} parent=11 // pred_check_branch
          %386 = sbr.rel (%p384) target = $region36
        $region35: #{tpu_custom_call.1} parent=11 // pred_region
          _
        $region36: #{tpu_custom_call.1} parent=11 // pred_fallthru
          _
        // Predicated region
        $region37: #{tpu_custom_call.1} parent=11 // pred_check
          %p387 = pneg %p197
        $region38: #{tpu_custom_call.1} parent=11 // pred_check_branch
          %389 = sbr.rel (%p387) target = $region40
        $region39: #{tpu_custom_call.1} parent=11 // pred_region
          _
        $region40: #{tpu_custom_call.1} parent=11 // pred_fallthru
          _
        // Predicated region
        $region41: #{tpu_custom_call.1} parent=11 // pred_check
          %p390 = pneg %p218
        $region42: #{tpu_custom_call.1} parent=11 // pred_check_branch
          %392 = sbr.rel (%p390) target = $region44
        $region43: #{tpu_custom_call.1} parent=11 // pred_region
          _
        $region44: #{tpu_custom_call.1} parent=11 // pred_fallthru
          _
        // Predicated region
        $region45: #{tpu_custom_call.1} parent=11 // pred_check
          %p393 = pneg %p239
        $region46: #{tpu_custom_call.1} parent=11 // pred_check_branch
          %395 = sbr.rel (%p393) target = $region48
        $region47: #{tpu_custom_call.1} parent=11 // pred_region
          _
        $region48: #{tpu_custom_call.1} parent=11 // pred_fallthru
          _
        // Predicated region
        $region49: #{tpu_custom_call.1} parent=11 // pred_check
          %p396 = pneg %p260
        $region50: #{tpu_custom_call.1} parent=11 // pred_check_branch
          %398 = sbr.rel (%p396) target = $region52
        $region51: #{tpu_custom_call.1} parent=11 // pred_region
          _
        $region52: #{tpu_custom_call.1} parent=11 // pred_fallthru
          _
        // Predicated region
        $region53: #{tpu_custom_call.1} parent=11 // pred_check
          %p399 = pneg %p281
        $region54: #{tpu_custom_call.1} parent=11 // pred_check_branch
          %401 = sbr.rel (%p399) target = $region56
        $region55: #{tpu_custom_call.1} parent=11 // pred_region
          _
        $region56: #{tpu_custom_call.1} parent=11 // pred_fallthru
          _
        // Predicated region
        $region57: #{tpu_custom_call.1} parent=11 // pred_check
          %p402 = pneg %p302
        $region58: #{tpu_custom_call.1} parent=11 // pred_check_branch
          %404 = sbr.rel (%p402) target = $region60
        $region59: #{tpu_custom_call.1} parent=11 // pred_region
          _
        $region60: #{tpu_custom_call.1} parent=11 // pred_fallthru
          _
      $region12: #{tpu_custom_call.1} parent=5 // pred_fallthru
        _
      %p405 = scmp.lt.s32.totalorder %s24, 2
      // Predicated region
      $region61: #{tpu_custom_call.1} parent=5 // pred_check
        %p406 = pneg %p405
      $region62: #{tpu_custom_call.1} parent=5 // pred_check_branch
        %408 = sbr.rel (%p406) target = $region64
      $region63: #{tpu_custom_call.1} parent=5 // pred_region
        // Predicated region
        $region65: #{tpu_custom_call.1} parent=63 // pred_check
          %p409 = pneg %p44
        $region66: #{tpu_custom_call.1} parent=63 // pred_check_branch
          %411 = sbr.rel (%p409) target = $region68
        $region67: #{tpu_custom_call.1} parent=63 // pred_region
          %s412 = smul.u32 4, %s24
          %p413 = scmp.lt.s32.totalorder %s412, 7
          %s414 = scalar_select %p413, %s412, 7
          %s415 = smul.addr %s414, 4
          %s416 = scalar_lea.vmem %s0, %s415
          %s417 = smul.u32 4, %s24
        $region68: #{tpu_custom_call.1} parent=63 // pred_fallthru
          _
      $region64: #{tpu_custom_call.1} parent=5 // pred_fallthru
        _
      %p418 = scmp.le.s32.totalorder 1, %s24
      %p419 = scmp.lt.s32.totalorder %s24, 3
      %p420 = pnand %p418, %p419
      %p421 = pneg %p420
      // Predicated region
      $region69: #{tpu_custom_call.1} parent=5 // pred_check
        _
      $region70: #{tpu_custom_call.1} parent=5 // pred_check_branch
        %423 = sbr.rel (%p420) target = $region72
      $region71: #{tpu_custom_call.1} parent=5 // pred_region
        %s424 = ssub.s32 %s24, 1
        %s425 = smul.u32 4, %s29
        %p426 = scmp.lt.s32.totalorder %s425, 7
        %s427 = scalar_select %p426, %s425, 7
        %s428 = smul.addr %s427, 4
        %s429 = scalar_lea.vmem %s0, %s428
        %p430 = pneg %p50
        %p431 = pneg %p47
        %p432 = pneg %p71
        %p433 = pneg %p68
        %p434 = pneg %p92
        %p435 = pneg %p89
        %p436 = pneg %p113
        %p437 = pneg %p110
        %p438 = pneg %p134
        %p439 = pneg %p131
        %p440 = pneg %p155
        %p441 = pneg %p152
        %p442 = pneg %p176
        %p443 = pneg %p173
        %p444 = pneg %p197
        %p445 = pneg %p194
        %p446 = pneg %p218
        %p447 = pneg %p215
        %p448 = pneg %p239
        %p449 = pneg %p236
        %p450 = pneg %p260
        %p451 = pneg %p257
        %p452 = pneg %p281
        %p453 = pneg %p278
        %p454 = pneg %p302
        %p455 = pneg %p299
        %p456 = pneg %p328
        %p457 = pneg %p325
        %s458 = sand.u32 %s315, 1
        %s459 = scalar_lea.sflag [#allocation3], %s458
        %s460 = sand.u32 %s315, 1
        %s461 = smul.addr %s460, 32
        %s462 = scalar_lea.vmem [#allocation2], %s461
        %p463 = pneg %p354
        %p464 = pneg %p351
        %s465 = smul.u32 4, %s29
        %p466 = scmp.lt.s32.totalorder %s465, 7
        %s467 = scalar_select %p466, %s465, 7
        %s468 = smul.addr %s467, 8
        %s469 = scalar_lea.vmem %s14, %s468
        %s470 = smul.u32 4, %s29
        %p471 = scmp.lt.s32.totalorder %s470, 7
        %s472 = scalar_select %p471, %s470, 7
        %s473 = smul.addr %s472, 4
        %s474 = scalar_lea.vmem %s0, %s473
        %s475 = smul.u32 4, %s29
        %s476 = smul.u32 4, %s29
        %s477 = smul.u32 4, %s29
        %p478 = scmp.lt.s32.totalorder %s477, 7
        %s479 = scalar_select %p478, %s477, 7
        %s480 = smul.addr %s479, 8
        %s481 = scalar_lea.vmem %s14, %s480
        %s482 = smul.u32 4, %s29
        %v484 = vld [vmem:[%s474] sm:$0xf]
        %v485 = vld [vmem:[%s474 + $0x4] sm:$0xf]
        %v486 = vld [vmem:[%s474 + $0x8] sm:$0xf]
        %v487 = vld [vmem:[%s474 + $0xc] sm:$0xf]
        %v488 = vld [vmem:[%s1] sm:$0xf]
        %v489 = vld [vmem:[%s1 + $0x4] sm:$0xf]
        %v490 = vld [vmem:[%s1 + $0x8] sm:$0xf]
        %v491 = vld [vmem:[%s1 + $0xc] sm:$0xf]
        %v492 = vld [vmem:[%s1 + $0x10] sm:$0xf]
        %v493 = vld [vmem:[%s1 + $0x14] sm:$0xf]
        %v494 = vld [vmem:[%s1 + $0x18] sm:$0xf]
        %v495 = vld [vmem:[%s1 + $0x1c] sm:$0xf]
        %v496 = vld [vmem:[%s1 + $0x20] sm:$0xf]
        %v497 = vld [vmem:[%s1 + $0x24] sm:$0xf]
        %v498 = vld [vmem:[%s1 + $0x28] sm:$0xf]
        %v499 = vld [vmem:[%s1 + $0x2c] sm:$0xf]
        %v500 = vld [vmem:[%s1 + $0x30] sm:$0xf]
        %v501 = vld [vmem:[%s1 + $0x34] sm:$0xf]
        %v502 = vld [vmem:[%s1 + $0x38] sm:$0xf]
        %v503 = vld [vmem:[%s1 + $0x3c] sm:$0xf]
        %v504 = vld [vmem:[%s2] sm:$0x1]
        %v506 = vperm.slane %v504, 0
        %v512 = vunpack.c.l.b16 %v484
        %v513 = vunpack.c.l.b16 %v485
        %v514 = vunpack.c.l.b16 %v486
        %v515 = vunpack.c.l.b16 %v487
        %v516 = vpack.c.b16 %v513, %v512
        %v517 = vpack.c.b16 %v515, %v514
        %v536 = vunpack.c.l.b16 %v488
        %v537 = vunpack.c.l.b16 %v489
        %v538 = vunpack.c.l.b16 %v490
        %v539 = vunpack.c.l.b16 %v491
        %v540 = vunpack.c.l.b16 %v492
        %v541 = vunpack.c.l.b16 %v493
        %v542 = vunpack.c.l.b16 %v494
        %v543 = vunpack.c.l.b16 %v495
        %v544 = vunpack.c.l.b16 %v496
        %v545 = vunpack.c.l.b16 %v497
        %v546 = vunpack.c.l.b16 %v498
        %v547 = vunpack.c.l.b16 %v499
        %v548 = vunpack.c.l.b16 %v500
        %v549 = vunpack.c.l.b16 %v501
        %v550 = vunpack.c.l.b16 %v502
        %v551 = vunpack.c.l.b16 %v503
        %v552 = vpack.c.b16 %v537, %v536
        %v553 = vpack.c.b16 %v539, %v538
        %v554 = vpack.c.b16 %v541, %v540
        %v555 = vpack.c.b16 %v543, %v542
        %v556 = vpack.c.b16 %v545, %v544
        %v557 = vpack.c.b16 %v547, %v546
        %v558 = vpack.c.b16 %v549, %v548
        %v559 = vpack.c.b16 %v551, %v550
        %568 = vmatpush.bf16.msra.mxu0 %v559
        %569 = vmatpush.bf16.msra.mxu0 %v558
        %570 = vmatpush.bf16.msra.mxu0 %v557
        %571 = vmatpush.bf16.msra.mxu0 %v556
        %572 = vmatpush.bf16.msra.mxu0 %v555
        %573 = vmatpush.bf16.msra.mxu0 %v554
        %574 = vmatpush.bf16.msra.mxu0 %v553
        %575 = vmatpush.bf16.msra.mxu0 %v552
        %576 = vmatmul.bf16.gmra.mxu0 %v516
        %v577 = vpop.f32.mrf.mxu0
        %v578 = vadd.f32 %v506, %v577
        %v579 = vpop.f32.mrf.mxu0
        %v580 = vadd.f32 %v506, %v579
        %581 = vmatmul.bf16.gmra.mxu0 %v517
        %v582 = vpop.f32.mrf.mxu0
        %v583 = vadd.f32 %v506, %v582
        %v584 = vpop.f32.mrf.mxu0
        %v585 = vadd.f32 %v506, %v584
        %586 = vdwg.mxu0
        %v587 = vtanh.pop %v578
        %v588 = vtanh.pop %v580
        %v589 = vtanh.pop %v583
        %v590 = vtanh.pop %v585
        %v591 = vpack.c.bf16 %v588, %v587
        %v592 = vpack.c.bf16 %v590, %v589
        %v593 = vld [vmem:[%s3] sm:$0xf]
        %v594 = vld [vmem:[%s3 + $0x4] sm:$0xf]
        %v595 = vld [vmem:[%s3 + $0x8] sm:$0xf]
        %v596 = vld [vmem:[%s3 + $0xc] sm:$0xf]
        %v597 = vld [vmem:[%s3 + $0x10] sm:$0xf]
        %v598 = vld [vmem:[%s3 + $0x14] sm:$0xf]
        %v599 = vld [vmem:[%s3 + $0x18] sm:$0xf]
        %v600 = vld [vmem:[%s3 + $0x1c] sm:$0xf]
        %v601 = vld [vmem:[%s4] sm:$0x1]
        %v603 = vperm.slane %v601, 0
        %v613 = vunpack.c.l.b16 %v593
        %v614 = vunpack.c.l.b16 %v594
        %v615 = vunpack.c.l.b16 %v595
        %v616 = vunpack.c.l.b16 %v596
        %v617 = vunpack.c.l.b16 %v597
        %v618 = vunpack.c.l.b16 %v598
        %v619 = vunpack.c.l.b16 %v599
        %v620 = vunpack.c.l.b16 %v600
        %v621 = vpack.c.b16 %v614, %v613
        %v622 = vpack.c.b16 %v616, %v615
        %v623 = vpack.c.b16 %v618, %v617
        %v624 = vpack.c.b16 %v620, %v619
        %vm629 = vcmask 523264
        %v631 = vsel %vm629, %v591, 0
        %v634 = vsel %vm629, %v592, 0
        %636 = vmatpush.bf16.msra.mxu0 0
        %637 = vmatpush.bf16.msra.mxu0 0
        %638 = vmatpush.bf16.msra.mxu0 0
        %639 = vmatpush.bf16.msra.mxu0 0
        %640 = vmatpush.bf16.msra.mxu0 %v624
        %641 = vmatpush.bf16.msra.mxu0 %v623
        %642 = vmatpush.bf16.msra.mxu0 %v622
        %643 = vmatpush.bf16.msra.mxu0 %v621
        %644 = vmatmul.bf16.gmra.mxu0 %v631
        %v645 = vpop.f32.mrf.mxu0
        %v646 = vadd.f32 %v603, %v645
        %v647 = vpop.f32.mrf.mxu0
        %v648 = vadd.f32 %v603, %v647
        %649 = vmatmul.bf16.gmra.mxu0 %v634
        %v650 = vpop.f32.mrf.mxu0
        %v651 = vadd.f32 %v603, %v650
        %v652 = vpop.f32.mrf.mxu0
        %v653 = vadd.f32 %v603, %v652
        %654 = vdwg.mxu0
        %v655 = vtanh.pop %v646
        %v656 = vtanh.pop %v648
        %v657 = vtanh.pop %v651
        %v658 = vtanh.pop %v653
        %v659 = vpack.c.bf16 %v656, %v655
        %v660 = vpack.c.bf16 %v658, %v657
        %v661 = vld [vmem:[%s5] sm:$0xf]
        %v662 = vld [vmem:[%s5 + $0x4] sm:$0xf]
        %v663 = vld [vmem:[%s5 + $0x8] sm:$0xf]
        %v664 = vld [vmem:[%s5 + $0xc] sm:$0xf]
        %v665 = vld [vmem:[%s6] sm:$0x1]
        %v667 = vperm.slane %v665, 0
        %v673 = vunpack.c.l.b16 %v661
        %v674 = vunpack.c.l.b16 %v662
        %v675 = vunpack.c.l.b16 %v663
        %v676 = vunpack.c.l.b16 %v664
        %v677 = vpack.c.b16 %v674, %v673
        %v678 = vpack.c.b16 %v676, %v675
        %vm681 = vcmask 261120
        %v683 = vsel %vm681, %v659, 0
        %v686 = vsel %vm681, %v660, 0
        %688 = vmatpush.bf16.msra.mxu0 0
        %689 = vmatpush.bf16.msra.mxu0 0
        %690 = vmatpush.bf16.msra.mxu0 0
        %691 = vmatpush.bf16.msra.mxu0 0
        %692 = vmatpush.bf16.msra.mxu0 0
        %693 = vmatpush.bf16.msra.mxu0 0
        %694 = vmatpush.bf16.msra.mxu0 %v678
        %695 = vmatpush.bf16.msra.mxu0 %v677
        %696 = vmatmul.bf16.gmra.mxu0 %v683
        %v697 = vpop.f32.mrf.mxu0
        %v698 = vadd.f32 %v667, %v697
        %v699 = vpop.f32.mrf.mxu0
        %v700 = vadd.f32 %v667, %v699
        %701 = vmatmul.bf16.gmra.mxu0 %v686
        %v702 = vpop.f32.mrf.mxu0
        %v703 = vadd.f32 %v667, %v702
        %v704 = vpop.f32.mrf.mxu0
        %v705 = vadd.f32 %v667, %v704
        %706 = vdwg.mxu0
        %v707 = vmul.f32 %v698, 1.442695
        %v708 = vpow.pop %v707
        %v709 = vmul.f32 %v700, 1.442695
        %v710 = vpow.pop %v709
        %v711 = vmul.f32 %v703, 1.442695
        %v712 = vpow.pop %v711
        %v713 = vmul.f32 %v705, 1.442695
        %v714 = vpow.pop %v713
        %v715 = vadd.f32 %v708, 1e-08
        %v716 = vadd.f32 %v710, 1e-08
        %v717 = vadd.f32 %v712, 1e-08
        %v718 = vadd.f32 %v714, 1e-08
        %v719 = vpack.c.bf16 %v700, %v698
        %v720 = vpack.c.bf16 %v705, %v703
        %v721 = vld [vmem:[%s7] sm:$0xf]
        %v722 = vld [vmem:[%s7 + $0x4] sm:$0xf]
        %v723 = vld [vmem:[%s8] sm:$0x1]
        %v725 = vperm.slane %v723, 0
        %v729 = vunpack.c.l.b16 %v721
        %v730 = vunpack.c.l.b16 %v722
        %v731 = vpack.c.b16 %v730, %v729
        %vm733 = vcmask 130048
        %v735 = vsel %vm733, %v719, 0
        %v738 = vsel %vm733, %v720, 0
        %740 = vmatpush.bf16.msra.mxu0 0
        %741 = vmatpush.bf16.msra.mxu0 0
        %742 = vmatpush.bf16.msra.mxu0 0
        %743 = vmatpush.bf16.msra.mxu0 0
        %744 = vmatpush.bf16.msra.mxu0 0
        %745 = vmatpush.bf16.msra.mxu0 0
        %746 = vmatpush.bf16.msra.mxu0 0
        %747 = vmatpush.bf16.msra.mxu0 %v731
        %748 = vmatmul.bf16.gmra.mxu0 %v735
        %v749 = vpop.f32.mrf.mxu0
        %v750 = vadd.f32 %v725, %v749
        %v751 = vpop.f32.mrf.mxu0
        %v752 = vadd.f32 %v725, %v751
        %753 = vmatmul.bf16.gmra.mxu0 %v738
        %v754 = vpop.f32.mrf.mxu0
        %v755 = vadd.f32 %v725, %v754
        %v756 = vpop.f32.mrf.mxu0
        %v757 = vadd.f32 %v725, %v756
        %758 = vdwg.mxu0
        %v759 = vtanh.pop %v750
        %v760 = vtanh.pop %v752
        %v761 = vtanh.pop %v755
        %v762 = vtanh.pop %v757
        %v763 = vpack.c.bf16 %v760, %v759
        %v764 = vpack.c.bf16 %v762, %v761
        %v765 = vld [vmem:[%s9] sm:$0xf]
        %v766 = vld [vmem:[%s9 + $0x4] sm:$0xf]
        %v767 = vld [vmem:[%s9 + $0x8] sm:$0xf]
        %v768 = vld [vmem:[%s9 + $0xc] sm:$0xf]
        %v769 = vld [vmem:[%s10] sm:$0x1]
        %v771 = vperm.slane %v769, 0
        %v777 = vunpack.c.l.b16 %v765
        %v778 = vunpack.c.l.b16 %v766
        %v779 = vunpack.c.l.b16 %v767
        %v780 = vunpack.c.l.b16 %v768
        %v781 = vpack.c.b16 %v778, %v777
        %v782 = vpack.c.b16 %v780, %v779
        %v786 = vsel %vm681, %v763, 0
        %v789 = vsel %vm681, %v764, 0
        %791 = vmatpush.bf16.msra.mxu0 0
        %792 = vmatpush.bf16.msra.mxu0 0
        %793 = vmatpush.bf16.msra.mxu0 0
        %794 = vmatpush.bf16.msra.mxu0 0
        %795 = vmatpush.bf16.msra.mxu0 0
        %796 = vmatpush.bf16.msra.mxu0 0
        %797 = vmatpush.bf16.msra.mxu0 %v782
        %798 = vmatpush.bf16.msra.mxu0 %v781
        %799 = vmatmul.bf16.gmra.mxu0 %v786
        %v800 = vpop.f32.mrf.mxu0
        %v801 = vadd.f32 %v771, %v800
        %v802 = vpop.f32.mrf.mxu0
        %v803 = vadd.f32 %v771, %v802
        %804 = vmatmul.bf16.gmra.mxu0 %v789
        %v805 = vpop.f32.mrf.mxu0
        %v806 = vadd.f32 %v771, %v805
        %v807 = vpop.f32.mrf.mxu0
        %v808 = vadd.f32 %v771, %v807
        %809 = vdwg.mxu0
        %v810 = vtanh.pop %v801
        %v811 = vtanh.pop %v803
        %v812 = vtanh.pop %v806
        %v813 = vtanh.pop %v808
        %v814 = vpack.c.bf16 %v811, %v810
        %v815 = vpack.c.bf16 %v813, %v812
        %v816 = vld [vmem:[%s11] sm:$0xf]
        %v817 = vld [vmem:[%s11 + $0x4] sm:$0xf]
        %v818 = vld [vmem:[%s11 + $0x8] sm:$0xf]
        %v819 = vld [vmem:[%s11 + $0xc] sm:$0xf]
        %v820 = vld [vmem:[%s11 + $0x10] sm:$0xf]
        %v821 = vld [vmem:[%s11 + $0x14] sm:$0xf]
        %v822 = vld [vmem:[%s11 + $0x18] sm:$0xf]
        %v823 = vld [vmem:[%s11 + $0x1c] sm:$0xf]
        %v824 = vld [vmem:[%s12] sm:$0x1]
        %v826 = vperm.slane %v824, 0
        %v836 = vunpack.c.l.b16 %v816
        %v837 = vunpack.c.l.b16 %v817
        %v838 = vunpack.c.l.b16 %v818
        %v839 = vunpack.c.l.b16 %v819
        %v840 = vunpack.c.l.b16 %v820
        %v841 = vunpack.c.l.b16 %v821
        %v842 = vunpack.c.l.b16 %v822
        %v843 = vunpack.c.l.b16 %v823
        %v844 = vpack.c.b16 %v837, %v836
        %v845 = vpack.c.b16 %v839, %v838
        %v846 = vpack.c.b16 %v841, %v840
        %v847 = vpack.c.b16 %v843, %v842
        %v853 = vsel %vm629, %v814, 0
        %v856 = vsel %vm629, %v815, 0
        %858 = vmatpush.bf16.msra.mxu0 0
        %859 = vmatpush.bf16.msra.mxu0 0
        %860 = vmatpush.bf16.msra.mxu0 0
        %861 = vmatpush.bf16.msra.mxu0 0
        %862 = vmatpush.bf16.msra.mxu0 %v847
        %863 = vmatpush.bf16.msra.mxu0 %v846
        %864 = vmatpush.bf16.msra.mxu0 %v845
        %865 = vmatpush.bf16.msra.mxu0 %v844
        %866 = vmatmul.bf16.gmra.mxu0 %v853
        %v867 = vpop.f32.mrf.mxu0
        %v868 = vadd.f32 %v826, %v867
        %v869 = vpop.f32.mrf.mxu0
        %v870 = vadd.f32 %v826, %v869
        %871 = vmatmul.bf16.gmra.mxu0 %v856
        %v872 = vpop.f32.mrf.mxu0
        %v873 = vadd.f32 %v826, %v872
        %v874 = vpop.f32.mrf.mxu0
        %v875 = vadd.f32 %v826, %v874
        %876 = vdwg.mxu0
        %877 = vst [vmem:[%s462] sm:$0xff] %v868
        %878 = vst [vmem:[%s462 + $0x8] sm:$0xff] %v870
        %879 = vst [vmem:[%s462 + $0x10] sm:$0xff] %v873
        %880 = vst [vmem:[%s462 + $0x18] sm:$0xff] %v875
        %v881 = vsel %vm733, %v698, %v715
        %v882 = vsel %vm733, %v700, %v716
        %v883 = vsel %vm733, %v703, %v717
        %v884 = vsel %vm733, %v705, %v718
        %885 = vst.msk [vmem:[%s481] sm:$0xff] %vm681, %v881
        %886 = vst.msk [vmem:[%s481 + $0x8] sm:$0xff] %vm681, %v882
        %887 = vst.msk [vmem:[%s481 + $0x10] sm:$0xff] %vm681, %v883
        %888 = vst.msk [vmem:[%s481 + $0x18] sm:$0xff] %vm681, %v884
        %s889 = sand.u32 %s315, 1
        %s890 = scalar_lea.sflag [#allocation3], %s889
        %s891 = sand.u32 %s315, 1
        %s892 = smul.addr %s891, 32
        %s893 = scalar_lea.vmem [#allocation2], %s892
        %s894 = smul.u32 4, %s29
        %p895 = scmp.lt.s32.totalorder %s894, 7
        %s896 = scalar_select %p895, %s894, 7
        %s897 = smul.addr %s896, 8
        %s898 = scalar_lea.vmem %s14, %s897
        // Predicated region
        $region73: #{tpu_custom_call.1} parent=71 // pred_check
          %p899 = pneg %p325
        $region74: #{tpu_custom_call.1} parent=71 // pred_check_branch
          %901 = sbr.rel (%p899) target = $region76
        $region75: #{tpu_custom_call.1} parent=71 // pred_region
          %s902 = smul.u32 4, %s29
          %904 = vsyncadd %s890, 0
          %s905 = smul.addr %s902, 8
          %s906 = scalar_lea.hbm %s13, %s905
          %s907 = sshll.u32 %s893, 4
          %s908 = int_to_ptr.vmem [resolvable:$true] %s907
          %s909 = sshll.u32 %s906, 4
          %s910 = int_to_ptr.hbm [resolvable:$true] %s909
          %915 = dma.vmem_to_hbm [thread:$0]  %s908, 512, %s910, %s890, 128, 128, 8
        $region76: #{tpu_custom_call.1} parent=71 // pred_fallthru
          _
        // Predicated region
        $region77: #{tpu_custom_call.1} parent=71 // pred_check
          %p916 = pneg %p351
        $region78: #{tpu_custom_call.1} parent=71 // pred_check_branch
          %918 = sbr.rel (%p916) target = $region80
        $region79: #{tpu_custom_call.1} parent=71 // pred_region
          %s919 = smul.u32 4, %s29
        $region80: #{tpu_custom_call.1} parent=71 // pred_fallthru
          _
      $region72: #{tpu_custom_call.1} parent=5 // pred_fallthru
        _
      %p920 = scmp.le.s32.totalorder 2, %s24
      // Predicated region
      $region81: #{tpu_custom_call.1} parent=5 // pred_check
        %p921 = pneg %p920
      $region82: #{tpu_custom_call.1} parent=5 // pred_check_branch
        %923 = sbr.rel (%p921) target = $region84
      $region83: #{tpu_custom_call.1} parent=5 // pred_region
        %s924 = ssub.s32 %s24, 2
        // Predicated region
        $region85: #{tpu_custom_call.1} parent=83 // pred_check
          %p925 = pneg %p331
        $region86: #{tpu_custom_call.1} parent=83 // pred_check_branch
          %927 = sbr.rel (%p925) target = $region88
        $region87: #{tpu_custom_call.1} parent=83 // pred_region
          %s928 = sand.u32 %s316, 1
          %s929 = scalar_lea.sflag [#allocation3], %s928
          %s930 = sand.u32 %s316, 1
          %s931 = smul.addr %s930, 32
          %s932 = scalar_lea.vmem [#allocation2], %s931
          %934 = dma.done %s929, 512
        $region88: #{tpu_custom_call.1} parent=83 // pred_fallthru
          _
        // Predicated region
        $region89: #{tpu_custom_call.1} parent=83 // pred_check
          %p935 = pneg %p357
        $region90: #{tpu_custom_call.1} parent=83 // pred_check_branch
          %937 = sbr.rel (%p935) target = $region92
        $region91: #{tpu_custom_call.1} parent=83 // pred_region
          %s938 = smul.u32 4, %s30
          %p939 = scmp.lt.s32.totalorder %s938, 7
          %s940 = scalar_select %p939, %s938, 7
          %s941 = smul.addr %s940, 8
          %s942 = scalar_lea.vmem %s14, %s941
        $region92: #{tpu_custom_call.1} parent=83 // pred_fallthru
          _
      $region84: #{tpu_custom_call.1} parent=5 // pred_fallthru
        _
    $region6: #{tpu_custom_call.1} parent=1 // loop_footer
      %s28 = sadd.s32 1, %s24
    $region7: #{tpu_custom_call.1} parent=1 // loop_footer_branch
      %23 = sbr.rel target = $region3
    $region8: #{tpu_custom_call.1} parent=1 // loop_exit
      _
    %943 = vsyncpa [#allocation3], 1
    %s944 = scalar_lea.sflag [#allocation3], 1
    %945 = vsyncpa %s944, 1

</llo_original>
